<compile_context>
chip_gen: v7x
topology: tpu7x:2x2x1
jax: 0.10.0
libtpu: 0.0.40
codegen_flags: <defaults>
</compile_context>

<pallas_src>
import functools

import jax
import jax.numpy as jnp
from jax.experimental import pallas as pl
from jax.experimental.pallas import tpu as pltpu


def _round_up(x, m):
    return (x + m - 1) // m * m


def _gem_kernel(x_ref, o_ref, acc_ref, *, p, eps, hw, tk, num_k, acc_w, needs_mask):
    # x_ref:   (TM, TK)    chunk of the flattened (B*C, H*W) input
    # o_ref:   (TM, 1)     output block (one pooled value per row)
    # acc_ref: (TM, ACC_W) f32 lane-wise running partial sums of max(x, eps)^p
    k = pl.program_id(1)

    @pl.when(k == 0)
    def _init():
        acc_ref[...] = jnp.zeros_like(acc_ref)

    def _accumulate(mask_last_chunk):
        x = x_ref[...].astype(jnp.float32)                    # (TM, TK)
        xp = jax.lax.integer_pow(jnp.maximum(x, eps), p)      # clamp(min=eps)^p, integer p
        if mask_last_chunk:
            # Only the final HW chunk overhangs; columns >= hw - k*tk hold
            # padded garbage (possibly NaN/inf) and must be dropped with a
            # select (NOT a clamp, which would add eps^p * pad_count).
            rem = hw - (num_k - 1) * tk                       # static remainder
            col = jax.lax.broadcasted_iota(jnp.int32, xp.shape, 1)
            xp = jnp.where(col < rem, xp, 0.0)
        if acc_w == 1:
            acc_ref[...] += jnp.sum(xp, axis=-1, keepdims=True)
        else:
            # Lane-aligned VALU adds per 128-lane group; the single cross-lane
            # (XLU) reduce happens once, in the epilogue.
            part = xp[:, 0:acc_w]
            for j in range(1, tk // acc_w):
                part = part + xp[:, j * acc_w:(j + 1) * acc_w]
            acc_ref[...] += part

    if needs_mask:
        @pl.when(k < num_k - 1)
        def _body():
            _accumulate(mask_last_chunk=False)

        @pl.when(k == num_k - 1)
        def _last():
            _accumulate(mask_last_chunk=True)
    else:
        _accumulate(mask_last_chunk=False)

    @pl.when(k == num_k - 1)
    def _finalize():
        total = acc_ref[...]
        if acc_w > 1:
            total = jnp.sum(total, axis=-1, keepdims=True)    # single XLU reduce
        mean = total * (1.0 / hw)                             # divide by true H*W, once
        # p-th root via exp/log: mean >= eps^p > 0, and this only touches the
        # O(B*C) outputs, so EUP cost is negligible.
        o_ref[...] = jnp.exp(jnp.log(mean) * (1.0 / p)).astype(o_ref.dtype)


def gem(x, p=3, eps=1e-6, *, tk_max=2048,
        target_block_bytes=4 * 1024 * 1024,
        vmem_block_budget=20 * 1024 * 1024,
        vmem_limit_bytes=32 * 1024 * 1024):
    """GeM pooling. x: (B, C, H, W) -> (B, C, 1, 1). p must be an integer
    (matches the module's `int(self.p.item())` semantics)."""
    assert float(p) == int(p), "GeM kernel bakes an integer p (module uses int(p.item()))."
    p = int(p)
    B, C, H, W = x.shape
    bc, hw = B * C, H * W
    xf = x.reshape(bc, hw)                               # free, contiguous reshape
    isz = jnp.dtype(x.dtype).itemsize

    # --- reduction-axis (HW) chunking: full extent if it fits, otherwise
    # balanced 128-multiple chunks (no mostly-padding trailing chunk). -------
    if hw <= tk_max:
        tk = hw                                          # full-extent dim is always legal
    else:
        n_chunks = pl.cdiv(hw, tk_max)
        tk = _round_up(pl.cdiv(hw, n_chunks), 128)
    num_k = pl.cdiv(hw, tk)
    needs_mask = (num_k * tk != hw)

    # --- row (B*C) tiling: no hard cap; grow until either the padded input
    # block hits ~target_block_bytes or the total resident VMEM hits the
    # budget.  (TM,1) / (TM,acc_w) buffers are lane-padded to 128 in VMEM, so
    # they (not their logical bytes) set the real ceiling for small HW. ------
    acc_w = 128 if (tk % 128 == 0) else 1
    tk_pad = _round_up(tk, 128)
    per_row_bytes = (2 * tk_pad * isz        # double-buffered input block (lane-padded)
                     + 2 * 128 * isz         # double-buffered (TM,1) output block (lane-padded)
                     + 128 * 4)              # f32 accumulator scratch (lane-padded)
    tm_budget = max(8, (vmem_block_budget // per_row_bytes) // 8 * 8)
    tm_input = max(8, (target_block_bytes // (tk_pad * isz)) // 8 * 8)
    tm = min(tm_budget, tm_input)
    if bc <= tm:
        tm = bc                                          # full-extent block is always legal
    num_rows = pl.cdiv(bc, tm)

    kernel = functools.partial(
        _gem_kernel, p=p, eps=float(eps), hw=hw, tk=tk, num_k=num_k,
        acc_w=acc_w, needs_mask=needs_mask)

    # Advisory cost hint: pure HBM-read-bound reduction.
    cost = pl.CostEstimate(
        flops=4 * bc * hw,                   # max + (p-1) muls + add per element, roughly
        transcendentals=2 * bc,              # final exp+log per output
        bytes_accessed=bc * hw * isz + bc * isz,
    )

    # TODO(synk): for very small HW (e.g. 7x7 f32 = 196 B/row), if profiling
    # shows row-granular DMA below HBM roofline, repack wrapper-side to a
    # lane-dense (BC//G, G*HW) view with an in-kernel segmented reduce.
    out = pl.pallas_call(
        kernel,
        out_shape=jax.ShapeDtypeStruct((bc, 1), x.dtype),
        grid_spec=pltpu.PrefetchScalarGridSpec(
            num_scalar_prefetch=0,
            grid=(num_rows, num_k),          # reduction axis last
            in_specs=[pl.BlockSpec((tm, tk), lambda i, k: (i, k))],
            out_specs=pl.BlockSpec((tm, 1), lambda i, k: (i, 0)),
            scratch_shapes=[pltpu.VMEM((tm, acc_w), jnp.float32)],
        ),
        compiler_params=pltpu.CompilerParams(
            # Row axis is independent -> "parallel"; reduction axis carries the
            # accumulator -> "arbitrary".  (On v7x, pltpu.CORE_PARALLEL on axis
            # 0 could be used if "parallel" alone does not shard across both
            # TensorCores.)
            dimension_semantics=("parallel", "arbitrary"),
            vmem_limit_bytes=vmem_limit_bytes,   # >= default, safe on v5e/v6e/v7x
        ),
        cost_estimate=cost,
    )(xf)

    return out.reshape(B, C, 1, 1)


if __name__ == "__main__":
    key = jax.random.PRNGKey(0)
    x = jax.random.normal(key, (2, 4, 16, 16), dtype=jnp.float32)
    p, eps = 3, 1e-6

    y = gem(x, p=p, eps=eps)
    jax.block_until_ready(y)

    # Reference: avg_pool2d(clamp(x, eps)^p, (H, W))^(1/p) over the full spatial extent.
    ref = jnp.mean(jnp.maximum(x, eps) ** p, axis=(2, 3), keepdims=True) ** (1.0 / p)
    assert y.shape == (2, 4, 1, 1), y.shape
    assert jnp.allclose(y, ref, atol=1e-5, rtol=1e-5), float(jnp.max(jnp.abs(y - ref)))

    print("KERNEL_OK")
</pallas_src>

<mosaic_0001>
module attributes {stable_mosaic.version = 11 : i64} {
  func.func @_gem_kernel(%arg0: i32, %arg1: i32, %arg2: memref<8x256xf32, #tpu.memory_space<vmem>>, %arg3: memref<8x1xf32, #tpu.memory_space<vmem>>, %arg4: memref<8x128xf32, #tpu.memory_space<vmem>>) attributes {dimension_semantics = [#tpu.dimension_semantics<parallel>, #tpu.dimension_semantics<arbitrary>], iteration_bounds = array<i64: 1, 1>, scalar_prefetch = 0 : i64, scratch_operands = 1 : i64, tpu.core_type = #tpu.core_type<tc>, window_params = [{transform_indices = @transform_0, window_bounds = array<i64: 8, 256>}, {transform_indices = @transform_1, window_bounds = array<i64: 8, 1>}]} {
    %c0_i32 = arith.constant 0 : i32
    %0 = arith.cmpi eq, %arg1, %c0_i32 : i32
    %1 = arith.extui %0 : i1 to i32
    %c0_i32_0 = arith.constant 0 : i32
    %2 = arith.cmpi ne, %1, %c0_i32_0 : i32
    scf.if %2 {
      %cst_8 = arith.constant 0.000000e+00 : f32
      %17 = vector.broadcast %cst_8 : f32 to vector<8x128xf32>
      %c0_9 = arith.constant 0 : index
      %c0_10 = arith.constant 0 : index
      %18 = vector.load %arg4[%c0_9, %c0_10] : memref<8x128xf32, #tpu.memory_space<vmem>>, vector<8x128xf32>
      tpu.vector_store %arg4[%c0_9, %c0_10], %17 {strides = array<i32>} : memref<8x128xf32, #tpu.memory_space<vmem>>, vector<8x128xf32>,
    } else {
    }
    %c0 = arith.constant 0 : index
    %c0_1 = arith.constant 0 : index
    %3 = vector.load %arg2[%c0, %c0_1] : memref<8x256xf32, #tpu.memory_space<vmem>>, vector<8x256xf32>
    %cst = arith.constant 9.99999997E-7 : f32
    %4 = vector.broadcast %cst : f32 to vector<8x256xf32>
    %5 = arith.maximumf %3, %4 : vector<8x256xf32>
    %6 = arith.mulf %5, %5 : vector<8x256xf32>
    %7 = arith.mulf %5, %6 : vector<8x256xf32>
    %8 = vector.extract_strided_slice %7 {offsets = [0, 0], sizes = [8, 128], strides = [1, 1]} : vector<8x256xf32> to vector<8x128xf32>
    %9 = vector.extract_strided_slice %7 {offsets = [0, 128], sizes = [8, 128], strides = [1, 1]} : vector<8x256xf32> to vector<8x128xf32>
    %10 = arith.addf %8, %9 : vector<8x128xf32>
    %c0_2 = arith.constant 0 : index
    %c0_3 = arith.constant 0 : index
    %11 = vector.load %arg4[%c0_2, %c0_3] : memref<8x128xf32, #tpu.memory_space<vmem>>, vector<8x128xf32>
    %12 = arith.addf %11, %10 : vector<8x128xf32>
    %c0_4 = arith.constant 0 : index
    %c0_5 = arith.constant 0 : index
    %13 = vector.load %arg4[%c0_4, %c0_5] : memref<8x128xf32, #tpu.memory_space<vmem>>, vector<8x128xf32>
    tpu.vector_store %arg4[%c0_4, %c0_5], %12 {strides = array<i32>} : memref<8x128xf32, #tpu.memory_space<vmem>>, vector<8x128xf32>,
    %c0_i32_6 = arith.constant 0 : i32
    %14 = arith.cmpi eq, %arg1, %c0_i32_6 : i32
    %15 = arith.extui %14 : i1 to i32
    %c0_i32_7 = arith.constant 0 : i32
    %16 = arith.cmpi ne, %15, %c0_i32_7 : i32
    scf.if %16 {
      %c0_8 = arith.constant 0 : index
      %c0_9 = arith.constant 0 : index
      %17 = vector.load %arg4[%c0_8, %c0_9] : memref<8x128xf32, #tpu.memory_space<vmem>>, vector<8x128xf32>
      %cst_10 = arith.constant dense<0.000000e+00> : vector<8xf32>
      %18 = vector.multi_reduction <add>, %17, %cst_10 [1] : vector<8x128xf32> to vector<8xf32>
      %19 = vector.shape_cast %18 : vector<8xf32> to vector<8x1xf32>
      %cst_11 = arith.constant 3.906250e-03 : f32
      %20 = vector.broadcast %cst_11 : f32 to vector<8x1xf32>
      %21 = arith.mulf %19, %20 : vector<8x1xf32>
      %22 = math.log %21 : vector<8x1xf32>
      %cst_12 = arith.constant 0.333333343 : f32
      %23 = vector.broadcast %cst_12 : f32 to vector<8x1xf32>
      %24 = arith.mulf %22, %23 : vector<8x1xf32>
      %25 = math.exp %24 : vector<8x1xf32>
      %c0_13 = arith.constant 0 : index
      %c0_14 = arith.constant 0 : index
      %26 = vector.load %arg3[%c0_13, %c0_14] : memref<8x1xf32, #tpu.memory_space<vmem>>, vector<8x1xf32>
      tpu.vector_store %arg3[%c0_13, %c0_14], %25 {strides = array<i32>} : memref<8x1xf32, #tpu.memory_space<vmem>>, vector<8x1xf32>,
    } else {
    }
    return
  }
  func.func @transform_0(%arg0: i32, %arg1: i32) -> (i32, i32) {
    %c0_i32 = arith.constant 0 : i32
    return %arg0, %arg1 : i32, i32
  }
  func.func @transform_1(%arg0: i32, %arg1: i32) -> (i32, i32) {
    %c0_i32 = arith.constant 0 : i32
    %c0_i32_0 = arith.constant 0 : i32
    return %arg0, %c0_i32 : i32, i32
  }
}

</mosaic_0001>

<llo_original>
// kernel: tpu_custom_call.1
$region0: #{tpu_custom_call.1}
  #allocation0 [shape = 'u32[]', space=smem, size = 0x4, offset = 0x4, fixed_abs, tag = 'smem constant byte address 0x4 - core index']
  #allocation1 [shape = 'u32[144,128]{1,0:T(1,128)}', space=vmem, size = 0x12000, scoped, tag = 'internal scratch']
  #allocation2 [shape = 'f32[8,128]{1,0:T(8,128)}', space=vmem, size = 0x1000, scoped, tag = 'scratch operand']
  %s0 = inlined_call_operand.hbm [shape: f32[8,256], index: 0, kind: input, shape index: {}]
  %s1 = inlined_call_operand.vmem [shape: f32[8,1], index: 1, kind: output, shape index: {}]
  %s2 = sld [smem:[#allocation0]]
  $region26: #{tpu_custom_call.1} parent=0
    _
  %s4 = ssub.s32 1, %s2
  %s5 = scalar_select 0, %s4, %s2
  $region1: #{tpu_custom_call.1} parent=0
    #allocation3 [shape = 'u8[8192]{0}', space=vmem, size = 0x2000, scoped, tag = 'input window, operand 0, single buffered']
    #allocation4 [shape = 's32[1]{0}', space=sflag, size = 0x4, scoped, tag = 'scoped memory for tpu_custom_call.1']
    %6 = vsyncpa [#allocation4], 0
    // Predicated region
    $region2: #{tpu_custom_call.1} parent=1 // pred_check
      _
    $region3: #{tpu_custom_call.1} parent=1 // pred_check_branch
      %8 = sbr.rel (0) target = $region5
    $region4: #{tpu_custom_call.1} parent=1 // pred_region
      %s10 = ssub.s32 256, 256
      %11 = vsyncadd [#allocation4], %s10
      %s13 = sshll.u32 [#allocation3], 4
      %s14 = int_to_ptr.vmem [resolvable:$true] %s13
      %16 = dma.hbm_to_vmem [thread:$0]  %s0, 256, %s14, [#allocation4]
    $region5: #{tpu_custom_call.1} parent=1 // pred_fallthru
      _
    // Predicated region
    $region6: #{tpu_custom_call.1} parent=1 // pred_check
      _
    $region7: #{tpu_custom_call.1} parent=1 // pred_check_branch
      %18 = sbr.rel (0) target = $region9
    $region8: #{tpu_custom_call.1} parent=1 // pred_region
      %19 = dma.done [#allocation4], 256
    $region9: #{tpu_custom_call.1} parent=1 // pred_fallthru
      _
    %p20 = scmp.eq.s32.totalorder 0, 0
    // Predicated region
    $region10: #{tpu_custom_call.1} parent=1 // pred_check
      %p21 = pneg %p20
    $region11: #{tpu_custom_call.1} parent=1 // pred_check_branch
      %23 = sbr.rel (%p21) target = $region13
    $region12: #{tpu_custom_call.1} parent=1 // pred_region
      %24 = vst [vmem:[#allocation2] sm:$0xff] 0.0
    $region13: #{tpu_custom_call.1} parent=1 // pred_fallthru
      _
    %v25 = vld [vmem:[#allocation3] sm:$0xff]
    %v26 = vld [vmem:[#allocation3 + $0x8] sm:$0xff]
    %v27 = vmax.f32 %v25, 1e-06
    %v28 = vmax.f32 %v26, 1e-06
    %v29 = vmul.f32 %v27, %v27
    %v30 = vmul.f32 %v28, %v28
    %v31 = vmul.f32 %v27, %v29
    %v32 = vmul.f32 %v28, %v30
    %v33 = vadd.f32 %v31, %v32
    %v34 = vld [vmem:[#allocation2] sm:$0xff]
    %v35 = vadd.f32 %v34, %v33
    %36 = vst [vmem:[#allocation2] sm:$0xff] %v35
    // Predicated region
    $region14: #{tpu_custom_call.1} parent=1 // pred_check
      %p37 = pneg %p20
    $region15: #{tpu_custom_call.1} parent=1 // pred_check_branch
      %39 = sbr.rel (%p37) target = $region17
    $region16: #{tpu_custom_call.1} parent=1 // pred_region
      %v40 = vld [vmem:[#allocation2] sm:$0xff]
      %41 = vadd.xlane.f32.xlu0 %v40
      %v42 = vpop.xlane.xlu0 %41
      %v43 = vmul.f32 %v42, 0.00390625
      %v44 = vlog2.pop %v43
      %v45 = vmul.f32 %v44, 0.6931472
      %v46 = vmul.f32 %v45, 0.33333334
      %v47 = vmul.f32 %v46, 1.442695
      %v48 = vpow.pop %v47
      %vm49 = vcmask 7168
      %50 = vst.msk [vmem:[%s1] sm:$0xff] %vm49, %v48
    $region17: #{tpu_custom_call.1} parent=1 // pred_fallthru
      _
    // Predicated region
    $region18: #{tpu_custom_call.1} parent=1 // pred_check
      _
    $region19: #{tpu_custom_call.1} parent=1 // pred_check_branch
      %52 = sbr.rel (0) target = $region21
    $region20: #{tpu_custom_call.1} parent=1 // pred_region
      _
    $region21: #{tpu_custom_call.1} parent=1 // pred_fallthru
      _
    // Predicated region
    $region22: #{tpu_custom_call.1} parent=1 // pred_check
      _
    $region23: #{tpu_custom_call.1} parent=1 // pred_check_branch
      %54 = sbr.rel (0) target = $region25
    $region24: #{tpu_custom_call.1} parent=1 // pred_region
      _
    $region25: #{tpu_custom_call.1} parent=1 // pred_fallthru
      _
    %55 = vsyncpa [#allocation4], 1

</llo_original>
